<compile_context>
chip_gen: v6e
topology: v6e:2x2x1
jax: 0.10.0
libtpu: 0.0.40
codegen_flags: <defaults>
</compile_context>

<pallas_src>
import jax
import jax.numpy as jnp
from jax.experimental import pallas as pl
from jax.experimental.pallas import tpu as pltpu


def policy_kernel(x_ref, w1_ref, b1_ref, w2_ref, b2_ref, wh_ref, bh_ref,
                  lo_ref, hi_ref, out_ref):
    x = x_ref[...]                                                # (S, tb)
    h1 = jnp.maximum(
        jnp.dot(w1_ref[...], x, preferred_element_type=jnp.float32)
        + b1_ref[...], 0.0)                                       # (H, tb)
    h2 = jnp.maximum(
        jnp.dot(w2_ref[...], h1, preferred_element_type=jnp.float32)
        + b2_ref[...], 0.0)                                       # (H, tb)
    # Fused heads: rows [0, A) are mean, [A, 2A) are log_std.
    heads = (jnp.dot(wh_ref[...], h2, preferred_element_type=jnp.float32)
             + bh_ref[...])                                       # (2A, tb)
    # Clamp only the log_std rows via precomputed bound columns (-inf/+inf on
    # the mean rows): two lane-dense VPU ops, no iota / select.
    heads = jnp.minimum(jnp.maximum(heads, lo_ref[...]), hi_ref[...])
    out_ref[...] = heads.astype(out_ref.dtype)


def policy_forward(state, params, *, max_tile=8192):
    """Fused MLP forward. state: [B, state_dim] f32 -> (mean, log_std)."""
    w1, b1, w2, b2, wm, bm, ws, bs = params   # weights [out, in], biases [out, 1]
    B, state_dim = state.shape
    hidden_dim = w1.shape[0]
    action_dim = wm.shape[0]

    # Fuse the two tiny head matmuls into one [2A, hidden] matmul.
    wh = jnp.concatenate([wm, ws], axis=0)                        # (2A, H)
    bh = jnp.concatenate([bm, bs], axis=0)                        # (2A, 1)
    lo = jnp.concatenate(
        [jnp.full((action_dim, 1), -jnp.inf, jnp.float32),
         jnp.full((action_dim, 1), -20.0, jnp.float32)], axis=0)  # (2A, 1)
    hi = jnp.concatenate(
        [jnp.full((action_dim, 1), jnp.inf, jnp.float32),
         jnp.full((action_dim, 1), 2.0, jnp.float32)], axis=0)    # (2A, 1)

    # Lane-aligned (128) batch tile; aim for >=2 grid steps whenever possible
    # so both v7x TensorCores get work.  max_tile=8192 keeps peak VMEM ~4 MB.
    target = max(128, min(max_tile, -(-B // 2)))
    tb = ((target + 127) // 128) * 128
    b_padded = ((B + tb - 1) // tb) * tb
    n_tiles = b_padded // tb

    # Batch-on-lanes: transpose once in the wrapper (review-sanctioned), pad
    # the lane axis to a multiple of the tile.
    state_t = state.T                                             # (S, B)
    if b_padded != B:
        state_t = jnp.pad(state_t, ((0, 0), (0, b_padded - B)))

    def resident(arr):
        # Full-array block, constant index_map -> DMA'd once, VMEM-resident.
        nd = arr.ndim
        return pl.BlockSpec(arr.shape, lambda i, _nd=nd: (0,) * _nd)

    in_specs = [
        pl.BlockSpec((state_dim, tb), lambda i: (0, i)),          # state tile streams
        resident(w1), resident(b1),
        resident(w2), resident(b2),
        resident(wh), resident(bh),
        resident(lo), resident(hi),
    ]
    out_spec = pl.BlockSpec((2 * action_dim, tb), lambda i: (0, i))

    weight_bytes = 4 * sum(int(a.size) for a in (w1, b1, w2, b2, wh, bh, lo, hi))
    cost = pl.CostEstimate(
        flops=2 * b_padded * (state_dim * hidden_dim
                              + hidden_dim * hidden_dim
                              + hidden_dim * 2 * action_dim),
        transcendentals=0,
        bytes_accessed=4 * b_padded * (state_dim + 2 * action_dim) + weight_bytes,
    )

    fused = pl.pallas_call(
        policy_kernel,
        out_shape=jax.ShapeDtypeStruct((2 * action_dim, b_padded), jnp.float32),
        grid=(n_tiles,),
        in_specs=in_specs,
        out_specs=out_spec,
        compiler_params=pltpu.CompilerParams(
            dimension_semantics=("parallel",)),   # v7x dual-TC; no-op on v5e/v6e
        cost_estimate=cost,
    )(state_t, w1, b1, w2, b2, wh, bh, lo, hi)

    fused = fused[:, :B]                                          # drop batch pad
    mean = fused[:action_dim].T                                   # (B, A)
    log_std = fused[action_dim:].T                                # (B, A)
    return mean, log_std


def init_params(key, state_dim, action_dim, hidden_dim):
    """PyTorch-style uniform(-1/sqrt(fan_in), 1/sqrt(fan_in)) init.

    Weights stored [out_features, in_features] (PyTorch-native), biases as
    [out_features, 1] columns so the kernel computes W @ x^T + b directly.
    """
    def linear(key, fan_in, fan_out):
        kw, kb = jax.random.split(key)
        bound = 1.0 / jnp.sqrt(jnp.float32(fan_in))
        w = jax.random.uniform(kw, (fan_out, fan_in), jnp.float32, -bound, bound)
        b = jax.random.uniform(kb, (fan_out, 1), jnp.float32, -bound, bound)
        return w, b

    k1, k2, k3, k4 = jax.random.split(key, 4)
    w1, b1 = linear(k1, state_dim, hidden_dim)
    w2, b2 = linear(k2, hidden_dim, hidden_dim)
    wm, bm = linear(k3, hidden_dim, action_dim)
    ws, bs = linear(k4, hidden_dim, action_dim)
    return (w1, b1, w2, b2, wm, bm, ws, bs)


def reference_forward(state, params):
    w1, b1, w2, b2, wm, bm, ws, bs = params
    x = jnp.maximum(state @ w1.T + b1.T, 0.0)
    x = jnp.maximum(x @ w2.T + b2.T, 0.0)
    mean = x @ wm.T + bm.T
    log_std = jnp.clip(x @ ws.T + bs.T, -20.0, 2.0)
    return mean, log_std


if __name__ == "__main__":
    state_dim, action_dim, hidden_dim = 16, 4, 32

    key = jax.random.PRNGKey(0)
    k_params, k_state1, k_state2 = jax.random.split(key, 3)
    params = init_params(k_params, state_dim, action_dim, hidden_dim)

    # Small single-tile case.
    batch = 8
    state = jax.random.normal(k_state1, (batch, state_dim), jnp.float32)
    mean, log_std = policy_forward(state, params)
    jax.block_until_ready((mean, log_std))
    mean_ref, log_std_ref = reference_forward(state, params)
    assert mean.shape == (batch, action_dim)
    assert log_std.shape == (batch, action_dim)
    assert jnp.allclose(mean, mean_ref, atol=1e-5, rtol=1e-5)
    assert jnp.allclose(log_std, log_std_ref, atol=1e-5, rtol=1e-5)

    # Multi-tile case (3 grid steps) to exercise the pipelined / padded path.
    batch2 = 300
    state2 = jax.random.normal(k_state2, (batch2, state_dim), jnp.float32)
    mean2, log_std2 = policy_forward(state2, params, max_tile=128)
    jax.block_until_ready((mean2, log_std2))
    mean2_ref, log_std2_ref = reference_forward(state2, params)
    assert mean2.shape == (batch2, action_dim)
    assert log_std2.shape == (batch2, action_dim)
    assert jnp.allclose(mean2, mean2_ref, atol=1e-5, rtol=1e-5)
    assert jnp.allclose(log_std2, log_std2_ref, atol=1e-5, rtol=1e-5)

    print("KERNEL_OK")
</pallas_src>

<mosaic_0001>
module attributes {stable_mosaic.version = 11 : i64} {
  func.func @policy_kernel(%arg0: i32, %arg1: memref<16x128xf32, #tpu.memory_space<vmem>>, %arg2: memref<32x16xf32, #tpu.memory_space<vmem>>, %arg3: memref<32x1xf32, #tpu.memory_space<vmem>>, %arg4: memref<32x32xf32, #tpu.memory_space<vmem>>, %arg5: memref<32x1xf32, #tpu.memory_space<vmem>>, %arg6: memref<8x32xf32, #tpu.memory_space<vmem>>, %arg7: memref<8x1xf32, #tpu.memory_space<vmem>>, %arg8: memref<8x1xf32, #tpu.memory_space<vmem>>, %arg9: memref<8x1xf32, #tpu.memory_space<vmem>>, %arg10: memref<8x128xf32, #tpu.memory_space<vmem>>) attributes {dimension_semantics = [#tpu.dimension_semantics<parallel>], iteration_bounds = array<i64: 1>, scalar_prefetch = 0 : i64, scratch_operands = 0 : i64, tpu.core_type = #tpu.core_type<tc>, window_params = [{transform_indices = @transform_0, window_bounds = array<i64: 16, 128>}, {pipeline_mode = #tpu.pipeline_mode<synchronous>, transform_indices = @transform_1, window_bounds = array<i64: 32, 16>}, {pipeline_mode = #tpu.pipeline_mode<synchronous>, transform_indices = @transform_2, window_bounds = array<i64: 32, 1>}, {pipeline_mode = #tpu.pipeline_mode<synchronous>, transform_indices = @transform_3, window_bounds = array<i64: 32, 32>}, {pipeline_mode = #tpu.pipeline_mode<synchronous>, transform_indices = @transform_4, window_bounds = array<i64: 32, 1>}, {pipeline_mode = #tpu.pipeline_mode<synchronous>, transform_indices = @transform_5, window_bounds = array<i64: 8, 32>}, {pipeline_mode = #tpu.pipeline_mode<synchronous>, transform_indices = @transform_6, window_bounds = array<i64: 8, 1>}, {pipeline_mode = #tpu.pipeline_mode<synchronous>, transform_indices = @transform_7, window_bounds = array<i64: 8, 1>}, {pipeline_mode = #tpu.pipeline_mode<synchronous>, transform_indices = @transform_8, window_bounds = array<i64: 8, 1>}, {transform_indices = @transform_9, window_bounds = array<i64: 8, 128>}]} {
    %c0 = arith.constant 0 : index
    %c0_0 = arith.constant 0 : index
    %0 = vector.load %arg1[%c0, %c0_0] : memref<16x128xf32, #tpu.memory_space<vmem>>, vector<16x128xf32>
    %c0_1 = arith.constant 0 : index
    %c0_2 = arith.constant 0 : index
    %1 = vector.load %arg2[%c0_1, %c0_2] : memref<32x16xf32, #tpu.memory_space<vmem>>, vector<32x16xf32>
    %cst = arith.constant dense<0.000000e+00> : vector<32x128xf32>
    %2 = tpu.matmul %1, %0, %cst {dimension_numbers = #tpu.dot_dimension_numbers<[1], [0], [0], [1], [0, 0, 1, 1], [], []>} : vector<32x16xf32>, vector<16x128xf32>, vector<32x128xf32> -> vector<32x128xf32>
    %c0_3 = arith.constant 0 : index
    %c0_4 = arith.constant 0 : index
    %3 = vector.load %arg3[%c0_3, %c0_4] : memref<32x1xf32, #tpu.memory_space<vmem>>, vector<32x1xf32>
    %4 = vector.broadcast %3 : vector<32x1xf32> to vector<32x128xf32>
    %5 = arith.addf %2, %4 : vector<32x128xf32>
    %cst_5 = arith.constant 0.000000e+00 : f32
    %6 = vector.broadcast %cst_5 : f32 to vector<32x128xf32>
    %7 = arith.maximumf %5, %6 : vector<32x128xf32>
    %c0_6 = arith.constant 0 : index
    %c0_7 = arith.constant 0 : index
    %8 = vector.load %arg4[%c0_6, %c0_7] : memref<32x32xf32, #tpu.memory_space<vmem>>, vector<32x32xf32>
    %cst_8 = arith.constant dense<0.000000e+00> : vector<32x128xf32>
    %9 = tpu.matmul %8, %7, %cst_8 {dimension_numbers = #tpu.dot_dimension_numbers<[1], [0], [0], [1], [0, 0, 1, 1], [], []>} : vector<32x32xf32>, vector<32x128xf32>, vector<32x128xf32> -> vector<32x128xf32>
    %c0_9 = arith.constant 0 : index
    %c0_10 = arith.constant 0 : index
    %10 = vector.load %arg5[%c0_9, %c0_10] : memref<32x1xf32, #tpu.memory_space<vmem>>, vector<32x1xf32>
    %11 = vector.broadcast %10 : vector<32x1xf32> to vector<32x128xf32>
    %12 = arith.addf %9, %11 : vector<32x128xf32>
    %cst_11 = arith.constant 0.000000e+00 : f32
    %13 = vector.broadcast %cst_11 : f32 to vector<32x128xf32>
    %14 = arith.maximumf %12, %13 : vector<32x128xf32>
    %c0_12 = arith.constant 0 : index
    %c0_13 = arith.constant 0 : index
    %15 = vector.load %arg6[%c0_12, %c0_13] : memref<8x32xf32, #tpu.memory_space<vmem>>, vector<8x32xf32>
    %cst_14 = arith.constant dense<0.000000e+00> : vector<8x128xf32>
    %16 = tpu.matmul %15, %14, %cst_14 {dimension_numbers = #tpu.dot_dimension_numbers<[1], [0], [0], [1], [0, 0, 1, 1], [], []>} : vector<8x32xf32>, vector<32x128xf32>, vector<8x128xf32> -> vector<8x128xf32>
    %c0_15 = arith.constant 0 : index
    %c0_16 = arith.constant 0 : index
    %17 = vector.load %arg7[%c0_15, %c0_16] : memref<8x1xf32, #tpu.memory_space<vmem>>, vector<8x1xf32>
    %18 = vector.broadcast %17 : vector<8x1xf32> to vector<8x128xf32>
    %19 = arith.addf %16, %18 : vector<8x128xf32>
    %c0_17 = arith.constant 0 : index
    %c0_18 = arith.constant 0 : index
    %20 = vector.load %arg8[%c0_17, %c0_18] : memref<8x1xf32, #tpu.memory_space<vmem>>, vector<8x1xf32>
    %21 = vector.broadcast %20 : vector<8x1xf32> to vector<8x128xf32>
    %22 = arith.maximumf %19, %21 : vector<8x128xf32>
    %c0_19 = arith.constant 0 : index
    %c0_20 = arith.constant 0 : index
    %23 = vector.load %arg9[%c0_19, %c0_20] : memref<8x1xf32, #tpu.memory_space<vmem>>, vector<8x1xf32>
    %24 = vector.broadcast %23 : vector<8x1xf32> to vector<8x128xf32>
    %25 = arith.minimumf %22, %24 : vector<8x128xf32>
    %c0_21 = arith.constant 0 : index
    %c0_22 = arith.constant 0 : index
    %26 = vector.load %arg10[%c0_21, %c0_22] : memref<8x128xf32, #tpu.memory_space<vmem>>, vector<8x128xf32>
    tpu.vector_store %arg10[%c0_21, %c0_22], %25 {strides = array<i32>} : memref<8x128xf32, #tpu.memory_space<vmem>>, vector<8x128xf32>,
    return
  }
  func.func @transform_0(%arg0: i32) -> (i32, i32) {
    %c0_i32 = arith.constant 0 : i32
    %c0_i32_0 = arith.constant 0 : i32
    return %c0_i32, %arg0 : i32, i32
  }
  func.func @transform_1(%arg0: i32) -> (i32, i32) {
    %c0_i32 = arith.constant 0 : i32
    %c0_i32_0 = arith.constant 0 : i32
    %c0_i32_1 = arith.constant 0 : i32
    return %c0_i32, %c0_i32_0 : i32, i32
  }
  func.func @transform_2(%arg0: i32) -> (i32, i32) {
    %c0_i32 = arith.constant 0 : i32
    %c0_i32_0 = arith.constant 0 : i32
    %c0_i32_1 = arith.constant 0 : i32
    return %c0_i32, %c0_i32_0 : i32, i32
  }
  func.func @transform_3(%arg0: i32) -> (i32, i32) {
    %c0_i32 = arith.constant 0 : i32
    %c0_i32_0 = arith.constant 0 : i32
    %c0_i32_1 = arith.constant 0 : i32
    return %c0_i32, %c0_i32_0 : i32, i32
  }
  func.func @transform_4(%arg0: i32) -> (i32, i32) {
    %c0_i32 = arith.constant 0 : i32
    %c0_i32_0 = arith.constant 0 : i32
    %c0_i32_1 = arith.constant 0 : i32
    return %c0_i32, %c0_i32_0 : i32, i32
  }
  func.func @transform_5(%arg0: i32) -> (i32, i32) {
    %c0_i32 = arith.constant 0 : i32
    %c0_i32_0 = arith.constant 0 : i32
    %c0_i32_1 = arith.constant 0 : i32
    return %c0_i32, %c0_i32_0 : i32, i32
  }
  func.func @transform_6(%arg0: i32) -> (i32, i32) {
    %c0_i32 = arith.constant 0 : i32
    %c0_i32_0 = arith.constant 0 : i32
    %c0_i32_1 = arith.constant 0 : i32
    return %c0_i32, %c0_i32_0 : i32, i32
  }
  func.func @transform_7(%arg0: i32) -> (i32, i32) {
    %c0_i32 = arith.constant 0 : i32
    %c0_i32_0 = arith.constant 0 : i32
    %c0_i32_1 = arith.constant 0 : i32
    return %c0_i32, %c0_i32_0 : i32, i32
  }
  func.func @transform_8(%arg0: i32) -> (i32, i32) {
    %c0_i32 = arith.constant 0 : i32
    %c0_i32_0 = arith.constant 0 : i32
    %c0_i32_1 = arith.constant 0 : i32
    return %c0_i32, %c0_i32_0 : i32, i32
  }
  func.func @transform_9(%arg0: i32) -> (i32, i32) {
    %c0_i32 = arith.constant 0 : i32
    %c0_i32_0 = arith.constant 0 : i32
    return %c0_i32, %arg0 : i32, i32
  }
}

</mosaic_0001>

<llo_original>
// kernel: tpu_custom_call.1
$region0: #{tpu_custom_call.1}
  #allocation0 [shape = 'u32[]', space=smem, size = 0x4, offset = 0x4, fixed_abs, tag = 'smem constant byte address 0x4 - core index']
  #allocation1 [shape = 'u32[144,128]{1,0:T(1,128)}', space=vmem, size = 0x12000, scoped, tag = 'internal scratch']
  %s0 = inlined_call_operand.vmem [shape: f32[16,128], index: 0, kind: input, shape index: {}]
  %s1 = inlined_call_operand.vmem [shape: f32[32,16], index: 1, kind: input, shape index: {}]
  %s2 = inlined_call_operand.vmem [shape: f32[32,1], index: 2, kind: input, shape index: {}]
  %s3 = inlined_call_operand.vmem [shape: f32[32,32], index: 3, kind: input, shape index: {}]
  %s4 = inlined_call_operand.vmem [shape: f32[32,1], index: 4, kind: input, shape index: {}]
  %s5 = inlined_call_operand.vmem [shape: f32[8,32], index: 5, kind: input, shape index: {}]
  %s6 = inlined_call_operand.vmem [shape: f32[8,1], index: 6, kind: input, shape index: {}]
  %s7 = inlined_call_operand.vmem [shape: f32[8,1], index: 7, kind: input, shape index: {}]
  %s8 = inlined_call_operand.vmem [shape: f32[8,1], index: 8, kind: input, shape index: {}]
  %s9 = inlined_call_operand.hbm [shape: f32[8,128], index: 9, kind: output, shape index: {}]
  %s10 = sld [smem:[#allocation0]]
  $region46: #{tpu_custom_call.1} parent=0
    _
  %s12 = ssub.s32 1, %s10
  %s13 = scalar_select 0, %s12, %s10
  $region1: #{tpu_custom_call.1} parent=0
    #allocation2 [shape = 'u8[4096]{0}', space=vmem, size = 0x1000, scoped, tag = 'output window, operand 0, single buffered']
    #allocation3 [shape = 's32[1]{0}', space=sflag, size = 0x4, scoped, tag = 'scoped memory for tpu_custom_call.1']
    %14 = vsyncpa [#allocation3], 0
    // Predicated region
    $region2: #{tpu_custom_call.1} parent=1 // pred_check
      _
    $region3: #{tpu_custom_call.1} parent=1 // pred_check_branch
      %16 = sbr.rel (0) target = $region5
    $region4: #{tpu_custom_call.1} parent=1 // pred_region
      _
    $region5: #{tpu_custom_call.1} parent=1 // pred_fallthru
      _
    // Predicated region
    $region6: #{tpu_custom_call.1} parent=1 // pred_check
      _
    $region7: #{tpu_custom_call.1} parent=1 // pred_check_branch
      %18 = sbr.rel (0) target = $region9
    $region8: #{tpu_custom_call.1} parent=1 // pred_region
      _
    $region9: #{tpu_custom_call.1} parent=1 // pred_fallthru
      _
    // Predicated region
    $region10: #{tpu_custom_call.1} parent=1 // pred_check
      _
    $region11: #{tpu_custom_call.1} parent=1 // pred_check_branch
      %20 = sbr.rel (0) target = $region13
    $region12: #{tpu_custom_call.1} parent=1 // pred_region
      _
    $region13: #{tpu_custom_call.1} parent=1 // pred_fallthru
      _
    // Predicated region
    $region14: #{tpu_custom_call.1} parent=1 // pred_check
      _
    $region15: #{tpu_custom_call.1} parent=1 // pred_check_branch
      %22 = sbr.rel (0) target = $region17
    $region16: #{tpu_custom_call.1} parent=1 // pred_region
      _
    $region17: #{tpu_custom_call.1} parent=1 // pred_fallthru
      _
    // Predicated region
    $region18: #{tpu_custom_call.1} parent=1 // pred_check
      _
    $region19: #{tpu_custom_call.1} parent=1 // pred_check_branch
      %24 = sbr.rel (0) target = $region21
    $region20: #{tpu_custom_call.1} parent=1 // pred_region
      _
    $region21: #{tpu_custom_call.1} parent=1 // pred_fallthru
      _
    // Predicated region
    $region22: #{tpu_custom_call.1} parent=1 // pred_check
      _
    $region23: #{tpu_custom_call.1} parent=1 // pred_check_branch
      %26 = sbr.rel (0) target = $region25
    $region24: #{tpu_custom_call.1} parent=1 // pred_region
      _
    $region25: #{tpu_custom_call.1} parent=1 // pred_fallthru
      _
    // Predicated region
    $region26: #{tpu_custom_call.1} parent=1 // pred_check
      _
    $region27: #{tpu_custom_call.1} parent=1 // pred_check_branch
      %28 = sbr.rel (0) target = $region29
    $region28: #{tpu_custom_call.1} parent=1 // pred_region
      _
    $region29: #{tpu_custom_call.1} parent=1 // pred_fallthru
      _
    // Predicated region
    $region30: #{tpu_custom_call.1} parent=1 // pred_check
      _
    $region31: #{tpu_custom_call.1} parent=1 // pred_check_branch
      %30 = sbr.rel (0) target = $region33
    $region32: #{tpu_custom_call.1} parent=1 // pred_region
      _
    $region33: #{tpu_custom_call.1} parent=1 // pred_fallthru
      _
    // Predicated region
    $region34: #{tpu_custom_call.1} parent=1 // pred_check
      _
    $region35: #{tpu_custom_call.1} parent=1 // pred_check_branch
      %32 = sbr.rel (0) target = $region37
    $region36: #{tpu_custom_call.1} parent=1 // pred_region
      _
    $region37: #{tpu_custom_call.1} parent=1 // pred_fallthru
      _
    %v33 = vld [vmem:[%s0] sm:$0xff]
    %v34 = vld [vmem:[%s0 + $0x8] sm:$0xff]
    %v35 = vld [vmem:[%s1] sm:$0xff]
    %v36 = vld [vmem:[%s1 + $0x8] sm:$0xff]
    %v37 = vld [vmem:[%s1 + $0x10] sm:$0xff]
    %v38 = vld [vmem:[%s1 + $0x18] sm:$0xff]
    %v39 = vld [vmem:[%s2] sm:$0xff]
    %v40 = vld [vmem:[%s2 + $0x8] sm:$0xff]
    %v41 = vld [vmem:[%s2 + $0x10] sm:$0xff]
    %v42 = vld [vmem:[%s2 + $0x18] sm:$0xff]
    %44 = vset.pattern.permute.xlu0 0
    %45 = vperm.xlu0 %44, %v39
    %v46 = vpop.permute.xlu0 %45
    %49 = vset.pattern.permute.xlu0 0
    %50 = vperm.xlu0 %49, %v40
    %v51 = vpop.permute.xlu0 %50
    %54 = vset.pattern.permute.xlu0 0
    %55 = vperm.xlu0 %54, %v41
    %v56 = vpop.permute.xlu0 %55
    %59 = vset.pattern.permute.xlu0 0
    %60 = vperm.xlu0 %59, %v42
    %v61 = vpop.permute.xlu0 %60
    %vm63 = vcmask 130048
    %v65 = vsel %vm63, %v35, 0
    %v68 = vsel %vm63, %v36, 0
    %v71 = vsel %vm63, %v37, 0
    %v74 = vsel %vm63, %v38, 0
    %76 = vmatprep.subr.mxu0 0.0
    %77 = vmatpush1.msra.mxu0 0.0
    %78 = vmatprep.subr.mxu0 0.0
    %79 = vmatpush1.msra.mxu0 0.0
    %80 = vmatprep.subr.mxu0 0.0
    %81 = vmatpush1.msra.mxu0 0.0
    %82 = vmatprep.subr.mxu0 0.0
    %83 = vmatpush1.msra.mxu0 0.0
    %84 = vmatprep.subr.mxu0 0.0
    %85 = vmatpush1.msra.mxu0 0.0
    %86 = vmatprep.subr.mxu0 0.0
    %87 = vmatpush1.msra.mxu0 0.0
    %88 = vmatprep.subr.mxu0 0.0
    %89 = vmatpush1.msra.mxu0 0.0
    %90 = vmatprep.subr.mxu0 0.0
    %91 = vmatpush1.msra.mxu0 0.0
    %92 = vmatprep.subr.mxu0 0.0
    %93 = vmatpush1.msra.mxu0 0.0
    %94 = vmatprep.subr.mxu0 0.0
    %95 = vmatpush1.msra.mxu0 0.0
    %96 = vmatprep.subr.mxu0 0.0
    %97 = vmatpush1.msra.mxu0 0.0
    %98 = vmatprep.subr.mxu0 0.0
    %99 = vmatpush1.msra.mxu0 0.0
    %100 = vmatprep.subr.mxu0 0.0
    %101 = vmatpush1.msra.mxu0 0.0
    %102 = vmatprep.subr.mxu0 0.0
    %103 = vmatpush1.msra.mxu0 0.0
    %104 = vmatprep.subr.mxu0 0.0
    %105 = vmatpush1.msra.mxu0 %v34
    %106 = vmatprep.subr.mxu0 0.0
    %107 = vmatpush1.msra.mxu0 %v33
    %108 = vmatprep.subr.mxu0 0.0
    %109 = vmatpush2.msra.mxu0 0.0
    %110 = vmatprep.subr.mxu0 0.0
    %111 = vmatpush2.msra.mxu0 0.0
    %112 = vmatprep.subr.mxu0 0.0
    %113 = vmatpush2.msra.mxu0 0.0
    %114 = vmatprep.subr.mxu0 0.0
    %115 = vmatpush2.msra.mxu0 0.0
    %116 = vmatprep.subr.mxu0 0.0
    %117 = vmatpush2.msra.mxu0 0.0
    %118 = vmatprep.subr.mxu0 0.0
    %119 = vmatpush2.msra.mxu0 0.0
    %120 = vmatprep.subr.mxu0 0.0
    %121 = vmatpush2.msra.mxu0 0.0
    %122 = vmatprep.subr.mxu0 0.0
    %123 = vmatpush2.msra.mxu0 0.0
    %124 = vmatprep.subr.mxu0 0.0
    %125 = vmatpush2.msra.mxu0 0.0
    %126 = vmatprep.subr.mxu0 0.0
    %127 = vmatpush2.msra.mxu0 0.0
    %128 = vmatprep.subr.mxu0 0.0
    %129 = vmatpush2.msra.mxu0 0.0
    %130 = vmatprep.subr.mxu0 0.0
    %131 = vmatpush2.msra.mxu0 0.0
    %132 = vmatprep.subr.mxu0 0.0
    %133 = vmatpush2.msra.mxu0 0.0
    %134 = vmatprep.subr.mxu0 0.0
    %135 = vmatpush2.msra.mxu0 0.0
    %136 = vmatprep.subr.mxu0 0.0
    %137 = vmatpush2.msra.mxu0 0.0
    %138 = vmatprep.subr.mxu0 0.0
    %139 = vmatpush2.msra.mxu0 0.0
    %140 = vmatprep.mubr.f32.mxu0 0.0
    %141 = vmatmul.mubr.f32.gmra.mxu0 %v65
    %v142 = vpop.f32.mrf.mxu0
    %v143 = vadd.f32 %v46, %v142
    %v144 = vpop.f32.mrf.mxu0
    %145 = vmatprep.mubr.f32.mxu0 0.0
    %146 = vmatmul.mubr.f32.gmra.mxu0 %v68
    %v147 = vpop.f32.mrf.mxu0
    %v148 = vadd.f32 %v51, %v147
    %v149 = vpop.f32.mrf.mxu0
    %150 = vmatprep.mubr.f32.mxu0 0.0
    %151 = vmatmul.mubr.f32.gmra.mxu0 %v71
    %v152 = vpop.f32.mrf.mxu0
    %v153 = vadd.f32 %v56, %v152
    %v154 = vpop.f32.mrf.mxu0
    %155 = vmatprep.mubr.f32.mxu0 0.0
    %156 = vmatmul.mubr.f32.gmra.mxu0 %v74
    %v157 = vpop.f32.mrf.mxu0
    %v158 = vadd.f32 %v61, %v157
    %v159 = vpop.f32.mrf.mxu0
    %160 = vdwg.mxu0
    %v161 = vmax.f32 %v143, 0.0
    %v162 = vmax.f32 %v148, 0.0
    %v163 = vmax.f32 %v153, 0.0
    %v164 = vmax.f32 %v158, 0.0
    %v165 = vld [vmem:[%s3] sm:$0xff]
    %v166 = vld [vmem:[%s3 + $0x8] sm:$0xff]
    %v167 = vld [vmem:[%s3 + $0x10] sm:$0xff]
    %v168 = vld [vmem:[%s3 + $0x18] sm:$0xff]
    %v169 = vld [vmem:[%s4] sm:$0xff]
    %v170 = vld [vmem:[%s4 + $0x8] sm:$0xff]
    %v171 = vld [vmem:[%s4 + $0x10] sm:$0xff]
    %v172 = vld [vmem:[%s4 + $0x18] sm:$0xff]
    %174 = vset.pattern.permute.xlu0 0
    %175 = vperm.xlu0 %174, %v169
    %v176 = vpop.permute.xlu0 %175
    %179 = vset.pattern.permute.xlu0 0
    %180 = vperm.xlu0 %179, %v170
    %v181 = vpop.permute.xlu0 %180
    %184 = vset.pattern.permute.xlu0 0
    %185 = vperm.xlu0 %184, %v171
    %v186 = vpop.permute.xlu0 %185
    %189 = vset.pattern.permute.xlu0 0
    %190 = vperm.xlu0 %189, %v172
    %v191 = vpop.permute.xlu0 %190
    %vm193 = vcmask 261120
    %v195 = vsel %vm193, %v165, 0
    %v198 = vsel %vm193, %v166, 0
    %v201 = vsel %vm193, %v167, 0
    %v204 = vsel %vm193, %v168, 0
    %206 = vmatprep.subr.mxu0 0.0
    %207 = vmatpush1.msra.mxu0 0.0
    %208 = vmatprep.subr.mxu0 0.0
    %209 = vmatpush1.msra.mxu0 0.0
    %210 = vmatprep.subr.mxu0 0.0
    %211 = vmatpush1.msra.mxu0 0.0
    %212 = vmatprep.subr.mxu0 0.0
    %213 = vmatpush1.msra.mxu0 0.0
    %214 = vmatprep.subr.mxu0 0.0
    %215 = vmatpush1.msra.mxu0 0.0
    %216 = vmatprep.subr.mxu0 0.0
    %217 = vmatpush1.msra.mxu0 0.0
    %218 = vmatprep.subr.mxu0 0.0
    %219 = vmatpush1.msra.mxu0 0.0
    %220 = vmatprep.subr.mxu0 0.0
    %221 = vmatpush1.msra.mxu0 0.0
    %222 = vmatprep.subr.mxu0 0.0
    %223 = vmatpush1.msra.mxu0 0.0
    %224 = vmatprep.subr.mxu0 0.0
    %225 = vmatpush1.msra.mxu0 0.0
    %226 = vmatprep.subr.mxu0 0.0
    %227 = vmatpush1.msra.mxu0 0.0
    %228 = vmatprep.subr.mxu0 0.0
    %229 = vmatpush1.msra.mxu0 0.0
    %230 = vmatprep.subr.mxu0 0.0
    %231 = vmatpush1.msra.mxu0 %v164
    %232 = vmatprep.subr.mxu0 0.0
    %233 = vmatpush1.msra.mxu0 %v163
    %234 = vmatprep.subr.mxu0 0.0
    %235 = vmatpush1.msra.mxu0 %v162
    %236 = vmatprep.subr.mxu0 0.0
    %237 = vmatpush1.msra.mxu0 %v161
    %238 = vmatprep.subr.mxu0 0.0
    %239 = vmatpush2.msra.mxu0 0.0
    %240 = vmatprep.subr.mxu0 0.0
    %241 = vmatpush2.msra.mxu0 0.0
    %242 = vmatprep.subr.mxu0 0.0
    %243 = vmatpush2.msra.mxu0 0.0
    %244 = vmatprep.subr.mxu0 0.0
    %245 = vmatpush2.msra.mxu0 0.0
    %246 = vmatprep.subr.mxu0 0.0
    %247 = vmatpush2.msra.mxu0 0.0
    %248 = vmatprep.subr.mxu0 0.0
    %249 = vmatpush2.msra.mxu0 0.0
    %250 = vmatprep.subr.mxu0 0.0
    %251 = vmatpush2.msra.mxu0 0.0
    %252 = vmatprep.subr.mxu0 0.0
    %253 = vmatpush2.msra.mxu0 0.0
    %254 = vmatprep.subr.mxu0 0.0
    %255 = vmatpush2.msra.mxu0 0.0
    %256 = vmatprep.subr.mxu0 0.0
    %257 = vmatpush2.msra.mxu0 0.0
    %258 = vmatprep.subr.mxu0 0.0
    %259 = vmatpush2.msra.mxu0 0.0
    %260 = vmatprep.subr.mxu0 0.0
    %261 = vmatpush2.msra.mxu0 0.0
    %262 = vmatprep.subr.mxu0 0.0
    %263 = vmatpush2.msra.mxu0 0.0
    %264 = vmatprep.subr.mxu0 0.0
    %265 = vmatpush2.msra.mxu0 0.0
    %266 = vmatprep.subr.mxu0 0.0
    %267 = vmatpush2.msra.mxu0 0.0
    %268 = vmatprep.subr.mxu0 0.0
    %269 = vmatpush2.msra.mxu0 0.0
    %270 = vmatprep.mubr.f32.mxu0 0.0
    %271 = vmatmul.mubr.f32.gmra.mxu0 %v195
    %v272 = vpop.f32.mrf.mxu0
    %v273 = vadd.f32 %v176, %v272
    %v274 = vpop.f32.mrf.mxu0
    %275 = vmatprep.mubr.f32.mxu0 0.0
    %276 = vmatmul.mubr.f32.gmra.mxu0 %v198
    %v277 = vpop.f32.mrf.mxu0
    %v278 = vadd.f32 %v181, %v277
    %v279 = vpop.f32.mrf.mxu0
    %280 = vmatprep.mubr.f32.mxu0 0.0
    %281 = vmatmul.mubr.f32.gmra.mxu0 %v201
    %v282 = vpop.f32.mrf.mxu0
    %v283 = vadd.f32 %v186, %v282
    %v284 = vpop.f32.mrf.mxu0
    %285 = vmatprep.mubr.f32.mxu0 0.0
    %286 = vmatmul.mubr.f32.gmra.mxu0 %v204
    %v287 = vpop.f32.mrf.mxu0
    %v288 = vadd.f32 %v191, %v287
    %v289 = vpop.f32.mrf.mxu0
    %290 = vdwg.mxu0
    %v291 = vmax.f32 %v273, 0.0
    %v292 = vmax.f32 %v278, 0.0
    %v293 = vmax.f32 %v283, 0.0
    %v294 = vmax.f32 %v288, 0.0
    %v295 = vld [vmem:[%s5] sm:$0xff]
    %v296 = vld [vmem:[%s6] sm:$0xff]
    %298 = vset.pattern.permute.xlu0 0
    %299 = vperm.xlu0 %298, %v296
    %v300 = vpop.permute.xlu0 %299
    %v303 = vsel %vm193, %v295, 0
    %305 = vmatprep.subr.mxu0 0.0
    %306 = vmatpush1.msra.mxu0 0.0
    %307 = vmatprep.subr.mxu0 0.0
    %308 = vmatpush1.msra.mxu0 0.0
    %309 = vmatprep.subr.mxu0 0.0
    %310 = vmatpush1.msra.mxu0 0.0
    %311 = vmatprep.subr.mxu0 0.0
    %312 = vmatpush1.msra.mxu0 0.0
    %313 = vmatprep.subr.mxu0 0.0
    %314 = vmatpush1.msra.mxu0 0.0
    %315 = vmatprep.subr.mxu0 0.0
    %316 = vmatpush1.msra.mxu0 0.0
    %317 = vmatprep.subr.mxu0 0.0
    %318 = vmatpush1.msra.mxu0 0.0
    %319 = vmatprep.subr.mxu0 0.0
    %320 = vmatpush1.msra.mxu0 0.0
    %321 = vmatprep.subr.mxu0 0.0
    %322 = vmatpush1.msra.mxu0 0.0
    %323 = vmatprep.subr.mxu0 0.0
    %324 = vmatpush1.msra.mxu0 0.0
    %325 = vmatprep.subr.mxu0 0.0
    %326 = vmatpush1.msra.mxu0 0.0
    %327 = vmatprep.subr.mxu0 0.0
    %328 = vmatpush1.msra.mxu0 0.0
    %329 = vmatprep.subr.mxu0 0.0
    %330 = vmatpush1.msra.mxu0 %v294
    %331 = vmatprep.subr.mxu0 0.0
    %332 = vmatpush1.msra.mxu0 %v293
    %333 = vmatprep.subr.mxu0 0.0
    %334 = vmatpush1.msra.mxu0 %v292
    %335 = vmatprep.subr.mxu0 0.0
    %336 = vmatpush1.msra.mxu0 %v291
    %337 = vmatprep.subr.mxu0 0.0
    %338 = vmatpush2.msra.mxu0 0.0
    %339 = vmatprep.subr.mxu0 0.0
    %340 = vmatpush2.msra.mxu0 0.0
    %341 = vmatprep.subr.mxu0 0.0
    %342 = vmatpush2.msra.mxu0 0.0
    %343 = vmatprep.subr.mxu0 0.0
    %344 = vmatpush2.msra.mxu0 0.0
    %345 = vmatprep.subr.mxu0 0.0
    %346 = vmatpush2.msra.mxu0 0.0
    %347 = vmatprep.subr.mxu0 0.0
    %348 = vmatpush2.msra.mxu0 0.0
    %349 = vmatprep.subr.mxu0 0.0
    %350 = vmatpush2.msra.mxu0 0.0
    %351 = vmatprep.subr.mxu0 0.0
    %352 = vmatpush2.msra.mxu0 0.0
    %353 = vmatprep.subr.mxu0 0.0
    %354 = vmatpush2.msra.mxu0 0.0
    %355 = vmatprep.subr.mxu0 0.0
    %356 = vmatpush2.msra.mxu0 0.0
    %357 = vmatprep.subr.mxu0 0.0
    %358 = vmatpush2.msra.mxu0 0.0
    %359 = vmatprep.subr.mxu0 0.0
    %360 = vmatpush2.msra.mxu0 0.0
    %361 = vmatprep.subr.mxu0 0.0
    %362 = vmatpush2.msra.mxu0 0.0
    %363 = vmatprep.subr.mxu0 0.0
    %364 = vmatpush2.msra.mxu0 0.0
    %365 = vmatprep.subr.mxu0 0.0
    %366 = vmatpush2.msra.mxu0 0.0
    %367 = vmatprep.subr.mxu0 0.0
    %368 = vmatpush2.msra.mxu0 0.0
    %369 = vmatprep.mubr.f32.mxu0 0.0
    %370 = vmatmul.mubr.f32.gmra.mxu0 %v303
    %v371 = vpop.f32.mrf.mxu0
    %v372 = vadd.f32 %v300, %v371
    %v373 = vpop.f32.mrf.mxu0
    %374 = vdwg.mxu0
    %v375 = vld [vmem:[%s7] sm:$0xff]
    %377 = vset.pattern.permute.xlu0 0
    %378 = vperm.xlu0 %377, %v375
    %v379 = vpop.permute.xlu0 %378
    %v381 = vmax.f32 %v372, %v379
    %v382 = vld [vmem:[%s8] sm:$0xff]
    %384 = vset.pattern.permute.xlu0 0
    %385 = vperm.xlu0 %384, %v382
    %v386 = vpop.permute.xlu0 %385
    %v388 = vmin.f32 %v381, %v386
    %389 = vst [vmem:[#allocation2] sm:$0xff] %v388
    // Predicated region
    $region38: #{tpu_custom_call.1} parent=1 // pred_check
      _
    $region39: #{tpu_custom_call.1} parent=1 // pred_check_branch
      %391 = sbr.rel (0) target = $region41
    $region40: #{tpu_custom_call.1} parent=1 // pred_region
      %s393 = ssub.s32 128, 128
      %394 = vsyncadd [#allocation3], %s393
      %s396 = sshll.u32 [#allocation2], 4
      %s397 = int_to_ptr.vmem [resolvable:$true] %s396
      %399 = dma.vmem_to_hbm [thread:$0]  %s397, 128, %s9, [#allocation3]
    $region41: #{tpu_custom_call.1} parent=1 // pred_fallthru
      _
    // Predicated region
    $region42: #{tpu_custom_call.1} parent=1 // pred_check
      _
    $region43: #{tpu_custom_call.1} parent=1 // pred_check_branch
      %401 = sbr.rel (0) target = $region45
    $region44: #{tpu_custom_call.1} parent=1 // pred_region
      %402 = dma.done [#allocation3], 128
    $region45: #{tpu_custom_call.1} parent=1 // pred_fallthru
      _
    %403 = vsyncpa [#allocation3], 1

</llo_original>
